<compile_context>
chip_gen: v7x
topology: tpu7x:2x2x1
jax: 0.10.0
libtpu: 0.0.40
codegen_flags: <defaults>
</compile_context>

<pallas_src>
import jax
import jax.numpy as jnp
from jax.experimental import pallas as pl
from jax.experimental.pallas import tpu as pltpu


def _make_kernel(dim, num_rows, num_cols, n_batch):
    r2 = num_rows // 2
    n_d2 = r2 - 1                     # number of second-difference rows
    inv_total = 1.0 / float(n_batch * n_d2 * num_cols)

    def kernel(x_ref, out_ref, acc_ref):
        b = pl.program_id(0)

        @pl.when(b == 0)
        def _():
            acc_ref[...] = jnp.zeros_like(acc_ref)

        xb = x_ref[...].astype(jnp.float32)          # (1, dim, R, C)

        # Fused softmax over the first (dim-1) channels + expected position:
        #   pos = (sum_k k * exp(x_k - m)) / (sum_k exp(x_k - m))
        m = xb[0, 0]
        for k in range(1, dim - 1):
            m = jnp.maximum(m, xb[0, k])
        den = jnp.zeros_like(m)
        num = jnp.zeros_like(m)
        for k in range(dim - 1):
            e = jnp.exp(xb[0, k] - m)
            den = den + e
            num = num + float(k) * e
        pos = num / den                              # (R, C)

        # d2_i = diff_i - diff_{i+1} = pos_i - 2*pos_{i+1} + pos_{i+2}
        d2 = (pos[0:n_d2] - 2.0 * pos[1:n_d2 + 1] + pos[2:n_d2 + 2])

        # Vector accumulation in VMEM; reduce to a scalar only once at the end.
        acc_ref[...] += d2 * d2

        @pl.when(b == pl.num_programs(0) - 1)
        def _():
            out_ref[0] = jnp.sum(acc_ref[...]) * inv_total

    return kernel


def parsing_relation_dis(x):
    """Pallas implementation of ParsingRelationDis.forward(x) -> scalar loss."""
    n, dim, num_rows, num_cols = x.shape
    assert dim >= 2, "need at least 2 channels (softmax over dim-1 channels)"
    r2 = num_rows // 2
    assert r2 >= 2, "need num_rows >= 4 (module divides by num_rows//2 - 1)"

    kernel = _make_kernel(dim, num_rows, num_cols, n)

    out = pl.pallas_call(
        kernel,
        out_shape=jax.ShapeDtypeStruct((1,), jnp.float32),
        grid_spec=pltpu.PrefetchScalarGridSpec(
            num_scalar_prefetch=0,
            grid=(n,),
            in_specs=[
                pl.BlockSpec((1, dim, num_rows, num_cols),
                             lambda b: (b, 0, 0, 0)),
            ],
            out_specs=pl.BlockSpec(memory_space=pltpu.SMEM),
            scratch_shapes=[pltpu.VMEM((r2 - 1, num_cols), jnp.float32)],
        ),
        compiler_params=pltpu.CompilerParams(
            dimension_semantics=("arbitrary",),
        ),
    )(x)
    return out[0]


def parsing_relation_dis_ref(x):
    """Pure-JAX reference matching the PyTorch module."""
    n, dim, num_rows, num_cols = x.shape
    p = jax.nn.softmax(x[:, : dim - 1].astype(jnp.float32), axis=1)
    emb = jnp.arange(dim - 1, dtype=jnp.float32).reshape(1, -1, 1, 1)
    pos = jnp.sum(p * emb, axis=1)                   # (n, R, C)
    r2 = num_rows // 2
    loss = 0.0
    for i in range(r2 - 1):
        d_i = pos[:, i] - pos[:, i + 1]
        d_ip1 = pos[:, i + 1] - pos[:, i + 2]
        loss = loss + jnp.mean((d_i - d_ip1) ** 2)
    return loss / (r2 - 1)


if __name__ == "__main__":
    key = jax.random.PRNGKey(0)

    # (N, dim, num_rows, num_cols): lane-detection-style classification volume.
    # num_cols = 128 keeps the minor dim lane-dense on TPU.
    shape = (2, 9, 16, 128)
    x = jax.random.normal(key, shape, dtype=jnp.float32)

    loss = jax.block_until_ready(parsing_relation_dis(x))
    ref = jax.block_until_ready(parsing_relation_dis_ref(x))

    assert jnp.allclose(loss, ref, rtol=1e-4, atol=1e-6), (loss, ref)
    print("KERNEL_OK")
</pallas_src>

<mosaic_0001>
module attributes {stable_mosaic.version = 11 : i64} {
  func.func @kernel(%arg0: i32, %arg1: memref<1x9x16x128xf32, #tpu.memory_space<vmem>>, %arg2: memref<1xf32, #tpu.memory_space<smem>>, %arg3: memref<7x128xf32, #tpu.memory_space<vmem>>) attributes {dimension_semantics = [#tpu.dimension_semantics<arbitrary>], iteration_bounds = array<i64: 2>, scalar_prefetch = 0 : i64, scratch_operands = 1 : i64, tpu.core_type = #tpu.core_type<tc>, window_params = [{transform_indices = @transform_0, window_bounds = array<i64: 1, 9, 16, 128>}, {transform_indices = @transform_1, window_bounds = array<i64: 1>}]} {
    %c0_i32 = arith.constant 0 : i32
    %0 = arith.cmpi eq, %arg0, %c0_i32 : i32
    %1 = arith.extui %0 : i1 to i32
    %c0_i32_0 = arith.constant 0 : i32
    %2 = arith.cmpi ne, %1, %c0_i32_0 : i32
    scf.if %2 {
      %cst_19 = arith.constant 0.000000e+00 : f32
      %108 = vector.broadcast %cst_19 : f32 to vector<7x128xf32>
      %c0_20 = arith.constant 0 : index
      %c0_21 = arith.constant 0 : index
      %109 = vector.load %arg3[%c0_20, %c0_21] : memref<7x128xf32, #tpu.memory_space<vmem>>, vector<7x128xf32>
      tpu.vector_store %arg3[%c0_20, %c0_21], %108 {strides = array<i32>} : memref<7x128xf32, #tpu.memory_space<vmem>>, vector<7x128xf32>,
    } else {
    }
    %c0 = arith.constant 0 : index
    %c0_1 = arith.constant 0 : index
    %c0_2 = arith.constant 0 : index
    %c0_3 = arith.constant 0 : index
    %3 = vector.load %arg1[%c0, %c0_1, %c0_2, %c0_3] : memref<1x9x16x128xf32, #tpu.memory_space<vmem>>, vector<1x9x16x128xf32>
    %4 = vector.extract_strided_slice %3 {offsets = [0, 0, 0, 0], sizes = [1, 1, 16, 128], strides = [1, 1, 1, 1]} : vector<1x9x16x128xf32> to vector<1x1x16x128xf32>
    %5 = vector.shape_cast %4 : vector<1x1x16x128xf32> to vector<16x128xf32>
    %6 = vector.extract_strided_slice %3 {offsets = [0, 1, 0, 0], sizes = [1, 1, 16, 128], strides = [1, 1, 1, 1]} : vector<1x9x16x128xf32> to vector<1x1x16x128xf32>
    %7 = vector.shape_cast %6 : vector<1x1x16x128xf32> to vector<16x128xf32>
    %8 = arith.maximumf %5, %7 : vector<16x128xf32>
    %9 = vector.extract_strided_slice %3 {offsets = [0, 2, 0, 0], sizes = [1, 1, 16, 128], strides = [1, 1, 1, 1]} : vector<1x9x16x128xf32> to vector<1x1x16x128xf32>
    %10 = vector.shape_cast %9 : vector<1x1x16x128xf32> to vector<16x128xf32>
    %11 = arith.maximumf %8, %10 : vector<16x128xf32>
    %12 = vector.extract_strided_slice %3 {offsets = [0, 3, 0, 0], sizes = [1, 1, 16, 128], strides = [1, 1, 1, 1]} : vector<1x9x16x128xf32> to vector<1x1x16x128xf32>
    %13 = vector.shape_cast %12 : vector<1x1x16x128xf32> to vector<16x128xf32>
    %14 = arith.maximumf %11, %13 : vector<16x128xf32>
    %15 = vector.extract_strided_slice %3 {offsets = [0, 4, 0, 0], sizes = [1, 1, 16, 128], strides = [1, 1, 1, 1]} : vector<1x9x16x128xf32> to vector<1x1x16x128xf32>
    %16 = vector.shape_cast %15 : vector<1x1x16x128xf32> to vector<16x128xf32>
    %17 = arith.maximumf %14, %16 : vector<16x128xf32>
    %18 = vector.extract_strided_slice %3 {offsets = [0, 5, 0, 0], sizes = [1, 1, 16, 128], strides = [1, 1, 1, 1]} : vector<1x9x16x128xf32> to vector<1x1x16x128xf32>
    %19 = vector.shape_cast %18 : vector<1x1x16x128xf32> to vector<16x128xf32>
    %20 = arith.maximumf %17, %19 : vector<16x128xf32>
    %21 = vector.extract_strided_slice %3 {offsets = [0, 6, 0, 0], sizes = [1, 1, 16, 128], strides = [1, 1, 1, 1]} : vector<1x9x16x128xf32> to vector<1x1x16x128xf32>
    %22 = vector.shape_cast %21 : vector<1x1x16x128xf32> to vector<16x128xf32>
    %23 = arith.maximumf %20, %22 : vector<16x128xf32>
    %24 = vector.extract_strided_slice %3 {offsets = [0, 7, 0, 0], sizes = [1, 1, 16, 128], strides = [1, 1, 1, 1]} : vector<1x9x16x128xf32> to vector<1x1x16x128xf32>
    %25 = vector.shape_cast %24 : vector<1x1x16x128xf32> to vector<16x128xf32>
    %26 = arith.maximumf %23, %25 : vector<16x128xf32>
    %cst = arith.constant 0.000000e+00 : f32
    %27 = vector.broadcast %cst : f32 to vector<16x128xf32>
    %cst_4 = arith.constant 0.000000e+00 : f32
    %28 = vector.broadcast %cst_4 : f32 to vector<16x128xf32>
    %29 = vector.extract_strided_slice %3 {offsets = [0, 0, 0, 0], sizes = [1, 1, 16, 128], strides = [1, 1, 1, 1]} : vector<1x9x16x128xf32> to vector<1x1x16x128xf32>
    %30 = vector.shape_cast %29 : vector<1x1x16x128xf32> to vector<16x128xf32>
    %31 = arith.subf %30, %26 : vector<16x128xf32>
    %32 = math.exp %31 : vector<16x128xf32>
    %33 = arith.addf %27, %32 : vector<16x128xf32>
    %cst_5 = arith.constant 0.000000e+00 : f32
    %34 = vector.broadcast %cst_5 : f32 to vector<16x128xf32>
    %35 = arith.mulf %34, %32 : vector<16x128xf32>
    %36 = arith.addf %28, %35 : vector<16x128xf32>
    %37 = vector.extract_strided_slice %3 {offsets = [0, 1, 0, 0], sizes = [1, 1, 16, 128], strides = [1, 1, 1, 1]} : vector<1x9x16x128xf32> to vector<1x1x16x128xf32>
    %38 = vector.shape_cast %37 : vector<1x1x16x128xf32> to vector<16x128xf32>
    %39 = arith.subf %38, %26 : vector<16x128xf32>
    %40 = math.exp %39 : vector<16x128xf32>
    %41 = arith.addf %33, %40 : vector<16x128xf32>
    %cst_6 = arith.constant 1.000000e+00 : f32
    %42 = vector.broadcast %cst_6 : f32 to vector<16x128xf32>
    %43 = arith.mulf %42, %40 : vector<16x128xf32>
    %44 = arith.addf %36, %43 : vector<16x128xf32>
    %45 = vector.extract_strided_slice %3 {offsets = [0, 2, 0, 0], sizes = [1, 1, 16, 128], strides = [1, 1, 1, 1]} : vector<1x9x16x128xf32> to vector<1x1x16x128xf32>
    %46 = vector.shape_cast %45 : vector<1x1x16x128xf32> to vector<16x128xf32>
    %47 = arith.subf %46, %26 : vector<16x128xf32>
    %48 = math.exp %47 : vector<16x128xf32>
    %49 = arith.addf %41, %48 : vector<16x128xf32>
    %cst_7 = arith.constant 2.000000e+00 : f32
    %50 = vector.broadcast %cst_7 : f32 to vector<16x128xf32>
    %51 = arith.mulf %50, %48 : vector<16x128xf32>
    %52 = arith.addf %44, %51 : vector<16x128xf32>
    %53 = vector.extract_strided_slice %3 {offsets = [0, 3, 0, 0], sizes = [1, 1, 16, 128], strides = [1, 1, 1, 1]} : vector<1x9x16x128xf32> to vector<1x1x16x128xf32>
    %54 = vector.shape_cast %53 : vector<1x1x16x128xf32> to vector<16x128xf32>
    %55 = arith.subf %54, %26 : vector<16x128xf32>
    %56 = math.exp %55 : vector<16x128xf32>
    %57 = arith.addf %49, %56 : vector<16x128xf32>
    %cst_8 = arith.constant 3.000000e+00 : f32
    %58 = vector.broadcast %cst_8 : f32 to vector<16x128xf32>
    %59 = arith.mulf %58, %56 : vector<16x128xf32>
    %60 = arith.addf %52, %59 : vector<16x128xf32>
    %61 = vector.extract_strided_slice %3 {offsets = [0, 4, 0, 0], sizes = [1, 1, 16, 128], strides = [1, 1, 1, 1]} : vector<1x9x16x128xf32> to vector<1x1x16x128xf32>
    %62 = vector.shape_cast %61 : vector<1x1x16x128xf32> to vector<16x128xf32>
    %63 = arith.subf %62, %26 : vector<16x128xf32>
    %64 = math.exp %63 : vector<16x128xf32>
    %65 = arith.addf %57, %64 : vector<16x128xf32>
    %cst_9 = arith.constant 4.000000e+00 : f32
    %66 = vector.broadcast %cst_9 : f32 to vector<16x128xf32>
    %67 = arith.mulf %66, %64 : vector<16x128xf32>
    %68 = arith.addf %60, %67 : vector<16x128xf32>
    %69 = vector.extract_strided_slice %3 {offsets = [0, 5, 0, 0], sizes = [1, 1, 16, 128], strides = [1, 1, 1, 1]} : vector<1x9x16x128xf32> to vector<1x1x16x128xf32>
    %70 = vector.shape_cast %69 : vector<1x1x16x128xf32> to vector<16x128xf32>
    %71 = arith.subf %70, %26 : vector<16x128xf32>
    %72 = math.exp %71 : vector<16x128xf32>
    %73 = arith.addf %65, %72 : vector<16x128xf32>
    %cst_10 = arith.constant 5.000000e+00 : f32
    %74 = vector.broadcast %cst_10 : f32 to vector<16x128xf32>
    %75 = arith.mulf %74, %72 : vector<16x128xf32>
    %76 = arith.addf %68, %75 : vector<16x128xf32>
    %77 = vector.extract_strided_slice %3 {offsets = [0, 6, 0, 0], sizes = [1, 1, 16, 128], strides = [1, 1, 1, 1]} : vector<1x9x16x128xf32> to vector<1x1x16x128xf32>
    %78 = vector.shape_cast %77 : vector<1x1x16x128xf32> to vector<16x128xf32>
    %79 = arith.subf %78, %26 : vector<16x128xf32>
    %80 = math.exp %79 : vector<16x128xf32>
    %81 = arith.addf %73, %80 : vector<16x128xf32>
    %cst_11 = arith.constant 6.000000e+00 : f32
    %82 = vector.broadcast %cst_11 : f32 to vector<16x128xf32>
    %83 = arith.mulf %82, %80 : vector<16x128xf32>
    %84 = arith.addf %76, %83 : vector<16x128xf32>
    %85 = vector.extract_strided_slice %3 {offsets = [0, 7, 0, 0], sizes = [1, 1, 16, 128], strides = [1, 1, 1, 1]} : vector<1x9x16x128xf32> to vector<1x1x16x128xf32>
    %86 = vector.shape_cast %85 : vector<1x1x16x128xf32> to vector<16x128xf32>
    %87 = arith.subf %86, %26 : vector<16x128xf32>
    %88 = math.exp %87 : vector<16x128xf32>
    %89 = arith.addf %81, %88 : vector<16x128xf32>
    %cst_12 = arith.constant 7.000000e+00 : f32
    %90 = vector.broadcast %cst_12 : f32 to vector<16x128xf32>
    %91 = arith.mulf %90, %88 : vector<16x128xf32>
    %92 = arith.addf %84, %91 : vector<16x128xf32>
    %93 = arith.divf %92, %89 : vector<16x128xf32>
    %94 = vector.extract_strided_slice %93 {offsets = [0, 0], sizes = [7, 128], strides = [1, 1]} : vector<16x128xf32> to vector<7x128xf32>
    %95 = vector.extract_strided_slice %93 {offsets = [1, 0], sizes = [7, 128], strides = [1, 1]} : vector<16x128xf32> to vector<7x128xf32>
    %cst_13 = arith.constant 2.000000e+00 : f32
    %96 = vector.broadcast %cst_13 : f32 to vector<7x128xf32>
    %97 = arith.mulf %96, %95 : vector<7x128xf32>
    %98 = arith.subf %94, %97 : vector<7x128xf32>
    %99 = vector.extract_strided_slice %93 {offsets = [2, 0], sizes = [7, 128], strides = [1, 1]} : vector<16x128xf32> to vector<7x128xf32>
    %100 = arith.addf %98, %99 : vector<7x128xf32>
    %c0_14 = arith.constant 0 : index
    %c0_15 = arith.constant 0 : index
    %101 = vector.load %arg3[%c0_14, %c0_15] : memref<7x128xf32, #tpu.memory_space<vmem>>, vector<7x128xf32>
    %102 = arith.mulf %100, %100 : vector<7x128xf32>
    %103 = arith.addf %101, %102 : vector<7x128xf32>
    %c0_16 = arith.constant 0 : index
    %c0_17 = arith.constant 0 : index
    %104 = vector.load %arg3[%c0_16, %c0_17] : memref<7x128xf32, #tpu.memory_space<vmem>>, vector<7x128xf32>
    tpu.vector_store %arg3[%c0_16, %c0_17], %103 {strides = array<i32>} : memref<7x128xf32, #tpu.memory_space<vmem>>, vector<7x128xf32>,
    %c1_i32 = arith.constant 1 : i32
    %105 = arith.cmpi eq, %arg0, %c1_i32 : i32
    %106 = arith.extui %105 : i1 to i32
    %c0_i32_18 = arith.constant 0 : i32
    %107 = arith.cmpi ne, %106, %c0_i32_18 : i32
    scf.if %107 {
      %c0_19 = arith.constant 0 : index
      %c0_20 = arith.constant 0 : index
      %108 = vector.load %arg3[%c0_19, %c0_20] : memref<7x128xf32, #tpu.memory_space<vmem>>, vector<7x128xf32>
      %109 = vector.shape_cast %108 : vector<7x128xf32> to vector<1x7x128xf32>
      %cst_21 = arith.constant dense<0.000000e+00> : vector<1xf32>
      %110 = vector.multi_reduction <add>, %109, %cst_21 [1, 2] : vector<1x7x128xf32> to vector<1xf32>
      %111 = vector.shape_cast %110 : vector<1xf32> to vector<1x1x1xf32>
      %112 = vector.extract %111[0, 0, 0] : f32 from vector<1x1x1xf32>
      %cst_22 = arith.constant 5.58035739E-4 : f32
      %113 = arith.mulf %112, %cst_22 : f32
      %c0_23 = arith.constant 0 : index
      %114 = memref.load %arg2[%c0_23] : memref<1xf32, #tpu.memory_space<smem>>
      memref.store %113, %arg2[%c0_23] : memref<1xf32, #tpu.memory_space<smem>>
    } else {
    }
    return
  }
  func.func @transform_0(%arg0: i32) -> (i32, i32, i32, i32) {
    %c0_i32 = arith.constant 0 : i32
    %c0_i32_0 = arith.constant 0 : i32
    %c0_i32_1 = arith.constant 0 : i32
    %c0_i32_2 = arith.constant 0 : i32
    return %arg0, %c0_i32, %c0_i32_0, %c0_i32_1 : i32, i32, i32, i32
  }
  func.func @transform_1(%arg0: i32) -> i32 {
    %c0_i32 = arith.constant 0 : i32
    %c0_i32_0 = arith.constant 0 : i32
    return %c0_i32 : i32
  }
}

</mosaic_0001>

<llo_original>
// kernel: tpu_custom_call.1
$region0: #{tpu_custom_call.1}
  #allocation0 [shape = 'u32[]', space=smem, size = 0x4, offset = 0x4, fixed_abs, tag = 'smem constant byte address 0x4 - core index']
  #allocation1 [shape = 'u32[144,128]{1,0:T(1,128)}', space=vmem, size = 0x12000, scoped, tag = 'internal scratch']
  #allocation2 [shape = 'f32[7,128]{1,0:T(8,128)}', space=vmem, size = 0x1000, scoped, tag = 'scratch operand']
  %s0 = inlined_call_operand.hbm [shape: f32[2,9,16,128], index: 0, kind: input, shape index: {}]
  %s1 = inlined_call_operand.hbm [shape: f32[1], index: 1, kind: output, shape index: {}]
  %s2 = sld [smem:[#allocation0]]
  $region49: #{tpu_custom_call.1} parent=0
    _
  %s4 = ssub.s32 1, %s2
  %s5 = scalar_select 0, %s4, %s2
  $region1: #{tpu_custom_call.1} parent=0
    #allocation3 [shape = 'u8[147456]{0}', space=vmem, size = 0x24000, scoped, tag = 'input window, operand 0']
    #allocation4 [shape = 's32[2]{0}', space=sflag, size = 0x8, scoped, tag = 'scoped memory for tpu_custom_call.1']
    #allocation5 [shape = 's32[2]{0}', space=sflag, size = 0x8, scoped, tag = 'scoped memory for tpu_custom_call.1']
    #allocation6 [shape = 'u8[512]{0}', space=smem, size = 0x200, scoped, tag = 'output window, operand 0, single buffered']
    %6 = vsyncpa [#allocation4], 0
    %s7 = scalar_lea.sflag [#allocation4], 1
    %8 = vsyncpa %s7, 0
    %9 = vsyncpa [#allocation5], 0
    loop: start=0, step=1, limit=4
    $region2: #{tpu_custom_call.1} parent=1 // loop_pre_header
      _
    $region3: #{tpu_custom_call.1} parent=1 // loop_header
      %s11 = sphi 0, %s15
      %p12 = scmp.ge.s32.totalorder %s11, 4
      %s21 = sphi 0, %s23
      %s24 = sphi 0, %s21
      %s25 = sphi 0, %s24
      %s41 = sphi 0, %s25
      %s45 = sphi 0, %s45
      %s47 = sphi 0, %s45
      %s48 = sphi 0, %s47
      %s62 = sphi 0, %s48
    $region4: #{tpu_custom_call.1} parent=1 // loop_header_branch
      %14 = sbr.rel (%p12) target = $region8
    $region5: #{tpu_custom_call.1} parent=1 // loop_body
      %s16 = ssub.s32 %s11, 1
      %s17 = ssub.s32 %s11, 2
      %s18 = sadd.s32 %s11, 1
      %s19 = ssub.s32 %s11, %s18
      %p20 = scmp.eq.s32.totalorder %s19, 0
      %s22 = sadd.s32 %s21, 1
      %s23 = scalar_select %p20, %s21, %s22
      %p26 = pneg %p20
      %p27 = scmp.eq.s32.totalorder %s11, 1
      %p28 = por %p26, %p27
      %p29 = scmp.ne.s32.totalorder %s21, %s24
      %p30 = scmp.eq.s32.totalorder %s11, 0
      %p31 = por %p29, %p30
      %p32 = scmp.ne.s32.totalorder %s21, %s24
      %p33 = scmp.eq.s32.totalorder %s16, 1
      %p34 = por %p32, %p33
      %p35 = scmp.ne.s32.totalorder %s24, %s25
      %p36 = scmp.eq.s32.totalorder %s16, 0
      %p37 = por %p35, %p36
      %p38 = scmp.ne.s32.totalorder %s24, %s25
      %p39 = scmp.eq.s32.totalorder %s17, 1
      %p40 = por %p38, %p39
      %p42 = scmp.ne.s32.totalorder %s25, %s41
      %p43 = scmp.eq.s32.totalorder %s17, 0
      %p44 = por %p42, %p43
      %s46 = sadd.s32 %s45, 1
      %p49 = scmp.eq.s32.totalorder %s11, 1
      %p50 = scmp.ne.s32.totalorder %s45, %s47
      %p51 = scmp.eq.s32.totalorder %s11, 0
      %p52 = por %p50, %p51
      %p53 = scmp.ne.s32.totalorder %s45, %s47
      %p54 = scmp.eq.s32.totalorder %s16, 1
      %p55 = por %p53, %p54
      %p56 = scmp.ne.s32.totalorder %s47, %s48
      %p57 = scmp.eq.s32.totalorder %s16, 0
      %p58 = por %p56, %p57
      %p59 = scmp.ne.s32.totalorder %s47, %s48
      %p60 = scmp.eq.s32.totalorder %s17, 1
      %p61 = por %p59, %p60
      %p63 = scmp.ne.s32.totalorder %s48, %s62
      %p64 = scmp.eq.s32.totalorder %s17, 0
      %p65 = por %p63, %p64
      %p66 = scmp.le.s32.totalorder 1, %s11
      %p67 = scmp.lt.s32.totalorder %s11, 3
      %p68 = pnand %p66, %p67
      %p69 = pneg %p68
      // Predicated region
      $region9: #{tpu_custom_call.1} parent=5 // pred_check
        _
      $region10: #{tpu_custom_call.1} parent=5 // pred_check_branch
        %71 = sbr.rel (%p68) target = $region12
      $region11: #{tpu_custom_call.1} parent=5 // pred_region
        %s72 = ssub.s32 %s11, 1
      $region12: #{tpu_custom_call.1} parent=5 // pred_fallthru
        _
      %p73 = scmp.lt.s32.totalorder %s11, 2
      // Predicated region
      $region13: #{tpu_custom_call.1} parent=5 // pred_check
        %p74 = pneg %p73
      $region14: #{tpu_custom_call.1} parent=5 // pred_check_branch
        %76 = sbr.rel (%p74) target = $region16
      $region15: #{tpu_custom_call.1} parent=5 // pred_region
        // Predicated region
        $region17: #{tpu_custom_call.1} parent=15 // pred_check
          %p77 = pneg %p31
        $region18: #{tpu_custom_call.1} parent=15 // pred_check_branch
          %79 = sbr.rel (%p77) target = $region20
        $region19: #{tpu_custom_call.1} parent=15 // pred_region
          %s80 = sand.u32 %s21, 1
          %s81 = scalar_lea.sflag [#allocation4], %s80
          %s82 = sand.u32 %s21, 1
          %s83 = smul.addr %s82, 144
          %s84 = scalar_lea.vmem [#allocation3], %s83
          %s86 = ssub.s32 2304, 2304
          %87 = vsyncadd %s81, %s86
          %s88 = smul.addr %s11, 18
          %s89 = smul.addr %s88, 128
          %s90 = scalar_lea.hbm %s0, %s89
          %s91 = sshll.u32 %s84, 4
          %s92 = int_to_ptr.vmem [resolvable:$true] %s91
          %97 = dma.hbm_to_vmem [thread:$0]  %s90, 2304, %s92, %s81, 128, 128, 8
        $region20: #{tpu_custom_call.1} parent=15 // pred_fallthru
          _
      $region16: #{tpu_custom_call.1} parent=5 // pred_fallthru
        _
      %p98 = scmp.le.s32.totalorder 1, %s11
      %p99 = scmp.lt.s32.totalorder %s11, 3
      %p100 = pnand %p98, %p99
      %p101 = pneg %p100
      // Predicated region
      $region21: #{tpu_custom_call.1} parent=5 // pred_check
        _
      $region22: #{tpu_custom_call.1} parent=5 // pred_check_branch
        %103 = sbr.rel (%p100) target = $region24
      $region23: #{tpu_custom_call.1} parent=5 // pred_region
        %s104 = ssub.s32 %s11, 1
        %s105 = sand.u32 %s24, 1
        %s106 = scalar_lea.sflag [#allocation4], %s105
        %s107 = sand.u32 %s24, 1
        %s108 = smul.addr %s107, 144
        %s109 = scalar_lea.vmem [#allocation3], %s108
        // Predicated region
        $region25: #{tpu_custom_call.1} parent=23 // pred_check
          %p110 = pneg %p37
        $region26: #{tpu_custom_call.1} parent=23 // pred_check_branch
          %112 = sbr.rel (%p110) target = $region28
        $region27: #{tpu_custom_call.1} parent=23 // pred_region
          %113 = dma.done %s106, 2304
        $region28: #{tpu_custom_call.1} parent=23 // pred_fallthru
          _
        %s114 = sand.u32 %s24, 1
        %s115 = scalar_lea.sflag [#allocation4], %s114
        %s116 = sand.u32 %s24, 1
        %s117 = smul.addr %s116, 144
        %s118 = scalar_lea.vmem [#allocation3], %s117
        %p119 = pneg %p37
        %p120 = pneg %p34
        %p121 = pneg %p58
        %p122 = pneg %p55
        %p123 = scmp.eq.s32.totalorder %s16, 0
        // Predicated region
        $region29: #{tpu_custom_call.1} parent=23 // pred_check
          %p124 = pneg %p123
        $region30: #{tpu_custom_call.1} parent=23 // pred_check_branch
          %126 = sbr.rel (%p124) target = $region32
        $region31: #{tpu_custom_call.1} parent=23 // pred_region
          %127 = vst [vmem:[#allocation2] sm:$0x7f] 0.0
        $region32: #{tpu_custom_call.1} parent=23 // pred_fallthru
          _
        %v128 = vld [vmem:[%s109] sm:$0xff]
        %v129 = vld [vmem:[%s109 + $0x8] sm:$0xff]
        %v130 = vld [vmem:[%s109 + $0x10] sm:$0xff]
        %v131 = vld [vmem:[%s109 + $0x18] sm:$0xff]
        %v132 = vld [vmem:[%s109 + $0x20] sm:$0xff]
        %v133 = vld [vmem:[%s109 + $0x28] sm:$0xff]
        %v134 = vld [vmem:[%s109 + $0x30] sm:$0xff]
        %v135 = vld [vmem:[%s109 + $0x38] sm:$0xff]
        %v136 = vld [vmem:[%s109 + $0x40] sm:$0xff]
        %v137 = vld [vmem:[%s109 + $0x48] sm:$0xff]
        %v138 = vld [vmem:[%s109 + $0x50] sm:$0xff]
        %v139 = vld [vmem:[%s109 + $0x58] sm:$0xff]
        %v140 = vld [vmem:[%s109 + $0x60] sm:$0xff]
        %v141 = vld [vmem:[%s109 + $0x68] sm:$0xff]
        %v142 = vld [vmem:[%s109 + $0x70] sm:$0xff]
        %v143 = vld [vmem:[%s109 + $0x78] sm:$0xff]
        %v144 = vmax.f32 %v128, %v130
        %v145 = vmax.f32 %v129, %v131
        %v146 = vmax.f32 %v144, %v132
        %v147 = vmax.f32 %v145, %v133
        %v148 = vmax.f32 %v146, %v134
        %v149 = vmax.f32 %v147, %v135
        %v150 = vmax.f32 %v148, %v136
        %v151 = vmax.f32 %v149, %v137
        %v152 = vmax.f32 %v150, %v138
        %v153 = vmax.f32 %v151, %v139
        %v154 = vmax.f32 %v152, %v140
        %v155 = vmax.f32 %v153, %v141
        %v156 = vmax.f32 %v154, %v142
        %v157 = vmax.f32 %v155, %v143
        %v158 = vsub.f32 %v128, %v156
        %v159 = vsub.f32 %v129, %v157
        %v160 = vmul.f32 %v158, 1.442695
        %v161 = vpow.pop %v160
        %v162 = vmul.f32 %v159, 1.442695
        %v163 = vpow.pop %v162
        %v164 = vadd.f32 %v161, 0.0
        %v165 = vadd.f32 %v163, 0.0
        %v166 = vmul.f32 %v161, 0.0
        %v167 = vmul.f32 %v163, 0.0
        %v168 = vadd.f32 %v166, 0.0
        %v169 = vadd.f32 %v167, 0.0
        %v170 = vsub.f32 %v130, %v156
        %v171 = vsub.f32 %v131, %v157
        %v172 = vmul.f32 %v170, 1.442695
        %v173 = vpow.pop %v172
        %v174 = vmul.f32 %v171, 1.442695
        %v175 = vpow.pop %v174
        %v176 = vadd.f32 %v164, %v173
        %v177 = vadd.f32 %v165, %v175
        %v178 = vadd.f32 %v168, %v173
        %v179 = vadd.f32 %v169, %v175
        %v180 = vsub.f32 %v132, %v156
        %v181 = vsub.f32 %v133, %v157
        %v182 = vmul.f32 %v180, 1.442695
        %v183 = vpow.pop %v182
        %v184 = vmul.f32 %v181, 1.442695
        %v185 = vpow.pop %v184
        %v186 = vadd.f32 %v176, %v183
        %v187 = vadd.f32 %v177, %v185
        %v188 = vmul.f32 %v183, 2.0
        %v189 = vmul.f32 %v185, 2.0
        %v190 = vadd.f32 %v178, %v188
        %v191 = vadd.f32 %v179, %v189
        %v192 = vsub.f32 %v134, %v156
        %v193 = vsub.f32 %v135, %v157
        %v194 = vmul.f32 %v192, 1.442695
        %v195 = vpow.pop %v194
        %v196 = vmul.f32 %v193, 1.442695
        %v197 = vpow.pop %v196
        %v198 = vadd.f32 %v186, %v195
        %v199 = vadd.f32 %v187, %v197
        %v200 = vmul.f32 %v195, 3.0
        %v201 = vmul.f32 %v197, 3.0
        %v202 = vadd.f32 %v190, %v200
        %v203 = vadd.f32 %v191, %v201
        %v204 = vsub.f32 %v136, %v156
        %v205 = vsub.f32 %v137, %v157
        %v206 = vmul.f32 %v204, 1.442695
        %v207 = vpow.pop %v206
        %v208 = vmul.f32 %v205, 1.442695
        %v209 = vpow.pop %v208
        %v210 = vadd.f32 %v198, %v207
        %v211 = vadd.f32 %v199, %v209
        %v212 = vmul.f32 %v207, 4.0
        %v213 = vmul.f32 %v209, 4.0
        %v214 = vadd.f32 %v202, %v212
        %v215 = vadd.f32 %v203, %v213
        %v216 = vsub.f32 %v138, %v156
        %v217 = vsub.f32 %v139, %v157
        %v218 = vmul.f32 %v216, 1.442695
        %v219 = vpow.pop %v218
        %v220 = vmul.f32 %v217, 1.442695
        %v221 = vpow.pop %v220
        %v222 = vadd.f32 %v210, %v219
        %v223 = vadd.f32 %v211, %v221
        %v224 = vmul.f32 %v219, 5.0
        %v225 = vmul.f32 %v221, 5.0
        %v226 = vadd.f32 %v214, %v224
        %v227 = vadd.f32 %v215, %v225
        %v228 = vsub.f32 %v140, %v156
        %v229 = vsub.f32 %v141, %v157
        %v230 = vmul.f32 %v228, 1.442695
        %v231 = vpow.pop %v230
        %v232 = vmul.f32 %v229, 1.442695
        %v233 = vpow.pop %v232
        %v234 = vadd.f32 %v222, %v231
        %v235 = vadd.f32 %v223, %v233
        %v236 = vmul.f32 %v231, 6.0
        %v237 = vmul.f32 %v233, 6.0
        %v238 = vadd.f32 %v226, %v236
        %v239 = vadd.f32 %v227, %v237
        %v240 = vsub.f32 %v142, %v156
        %v241 = vsub.f32 %v143, %v157
        %v242 = vmul.f32 %v240, 1.442695
        %v243 = vpow.pop %v242
        %v244 = vmul.f32 %v241, 1.442695
        %v245 = vpow.pop %v244
        %v246 = vadd.f32 %v234, %v243
        %v247 = vadd.f32 %v235, %v245
        %v248 = vmul.f32 %v243, 7.0
        %v249 = vmul.f32 %v245, 7.0
        %v250 = vadd.f32 %v238, %v248
        %v251 = vadd.f32 %v239, %v249
        %v252 = vrcp.pop %v246
        %v253 = vmul.f32 %v250, %v252
        %v254 = vrcp.pop %v247
        %v255 = vmul.f32 %v251, %v254
        %v256 = vmul.f32 %v253, 2.0
        %v258 = vrot.slane %v256, 1
        %v260 = vsub.f32 %v253, %v258
        %vm263 = vcmask 1045504
        %v264 = vrot.slane %v253, 2
        %v265 = vrot.slane %v255, 2
        %v266 = vsel %vm263, %v264, %v265
        %v268 = vadd.f32 %v260, %v266
        %v269 = vld [vmem:[#allocation2] sm:$0x7f]
        %v270 = vmul.f32 %v268, %v268
        %v271 = vadd.f32 %v269, %v270
        %272 = vst [vmem:[#allocation2] sm:$0x7f] %v271
        %p273 = scmp.eq.s32.totalorder %s16, 1
        // Predicated region
        $region33: #{tpu_custom_call.1} parent=23 // pred_check
          %p274 = pneg %p273
        $region34: #{tpu_custom_call.1} parent=23 // pred_check_branch
          %276 = sbr.rel (%p274) target = $region36
        $region35: #{tpu_custom_call.1} parent=23 // pred_region
          %v277 = vld [vmem:[#allocation2] sm:$0x7f]
          %vm278 = vcmask 1046528
          %v279 = vsel %vm278, %v277, 0.0
          %280 = vadd.xlane.f32.xlu0 %v279
          %v281 = vpop.xlane.xlu0 %280
          %v282 = vrot.slane %v281, 4
          %v283 = vadd.f32 %v281, %v282
          %v284 = vrot.slane %v283, 2
          %v285 = vadd.f32 %v283, %v284
          %v286 = vrot.slane %v285, 1
          %v287 = vadd.f32 %v285, %v286
          %s288 = vtos %v287
          %s289 = smul.f32 %s288, 0.00055803574
          %s290 = scalar_lea.smem [#allocation6], 0
          %291 = sst [smem:[%s290]] %s289
        $region36: #{tpu_custom_call.1} parent=23 // pred_fallthru
          _
        // Predicated region
        $region37: #{tpu_custom_call.1} parent=23 // pred_check
          %p292 = pneg %p55
        $region38: #{tpu_custom_call.1} parent=23 // pred_check_branch
          %294 = sbr.rel (%p292) target = $region40
        $region39: #{tpu_custom_call.1} parent=23 // pred_region
          %s296 = ssub.s32 16, 16
          %297 = vsyncadd [#allocation5], %s296
          %300 = dma.smem_to_hbm [#allocation6], 16, %s1, [#allocation5]
        $region40: #{tpu_custom_call.1} parent=23 // pred_fallthru
          _
        // Predicated region
        $region41: #{tpu_custom_call.1} parent=23 // pred_check
          %p301 = pneg %p55
        $region42: #{tpu_custom_call.1} parent=23 // pred_check_branch
          %303 = sbr.rel (%p301) target = $region44
        $region43: #{tpu_custom_call.1} parent=23 // pred_region
          %304 = dma.done [#allocation5], 16
        $region44: #{tpu_custom_call.1} parent=23 // pred_fallthru
          _
        %305 = sfence
      $region24: #{tpu_custom_call.1} parent=5 // pred_fallthru
        _
      %p306 = scmp.le.s32.totalorder 2, %s11
      // Predicated region
      $region45: #{tpu_custom_call.1} parent=5 // pred_check
        %p307 = pneg %p306
      $region46: #{tpu_custom_call.1} parent=5 // pred_check_branch
        %309 = sbr.rel (%p307) target = $region48
      $region47: #{tpu_custom_call.1} parent=5 // pred_region
        %s310 = ssub.s32 %s11, 2
      $region48: #{tpu_custom_call.1} parent=5 // pred_fallthru
        _
    $region6: #{tpu_custom_call.1} parent=1 // loop_footer
      %s15 = sadd.s32 1, %s11
    $region7: #{tpu_custom_call.1} parent=1 // loop_footer_branch
      %10 = sbr.rel target = $region3
    $region8: #{tpu_custom_call.1} parent=1 // loop_exit
      _
    %311 = vsyncpa [#allocation4], 1
    %s312 = scalar_lea.sflag [#allocation4], 1
    %313 = vsyncpa %s312, 1
    %314 = vsyncpa [#allocation5], 1
    %s315 = scalar_lea.sflag [#allocation5], 1
    %316 = vsyncpa %s315, 1

</llo_original>
